<compile_context>
chip_gen: v6e
topology: v6e:2x2x1
jax: 0.10.0
libtpu: 0.0.40
codegen_flags: <defaults>
</compile_context>

<pallas_src>
import math

import jax
import jax.numpy as jnp
from jax.experimental import pallas as pl
from jax.experimental.pallas import tpu as pltpu


# ----------------------------------------------------------------------------
# Kernel: scale three input blocks by SMEM scalars and emit the concatenated
# output block with a single full-width store.
# ----------------------------------------------------------------------------
def _weight_fused_kernel(w_ref, a_ref, b_ref, c_ref, o_ref):
    wa = w_ref[0]                                   # f32 scalars from SMEM
    wb = w_ref[1]
    wc = w_ref[2]
    # One unmasked store of the whole (lt, dt) block instead of three masked
    # partial-lane stores; the concat lowers to XLU lane shifts + VPU selects.
    o_ref[...] = jnp.concatenate(
        [
            (wa * a_ref[...]).astype(o_ref.dtype),
            (wb * b_ref[...]).astype(o_ref.dtype),
            (wc * c_ref[...]).astype(o_ref.dtype),
        ],
        axis=-1,
    )


def _sublane_packing(dtype) -> int:
    """Rows per packed 32-bit sublane group for this dtype (8 f32, 16 bf16, 32 i8)."""
    itemsize = jnp.dtype(dtype).itemsize
    return max(8, 32 // max(1, itemsize))


def _choose_row_tile(L, per_row_padded_bytes, sub):
    """Pick the row tile lt: as large as VMEM allows, with >=~4 grid steps."""
    # Physical VMEM (generation-aware); conservative fallback = 64 MiB (v7x).
    try:
        phys_vmem = int(pltpu.get_tpu_info().vmem_capacity_bytes)
    except Exception:
        phys_vmem = 64 << 20
    # Spend up to ~half of physical VMEM on the double-buffered blocks.
    block_budget = phys_vmem // 2
    lt_cap_vmem = max(sub, block_budget // (2 * per_row_padded_bytes))

    if L <= sub:
        # Tiny problem: a single full-extent block (satisfies full-dim rule).
        return L, phys_vmem

    # Keep at least ~4 evenly sized steps so both v7x TCs get work and the
    # pipeline prologue/epilogue is amortized.
    lt_cap_steps = max(sub, ((L // 4) // sub) * sub)

    lt = min(lt_cap_vmem, lt_cap_steps)
    lt = max(sub, (lt // sub) * sub)
    # Never exceed the (sublane-rounded) row extent.
    lt = min(lt, ((L + sub - 1) // sub) * sub)
    return lt, phys_vmem


def weight_fused_forward(params, a, b, c):
    """WeightFused.forward: concat([wa*a, wb*b, wc*c], axis=-1).

    a, b, c share all leading dims and may differ in the last dim.
    """
    lead = a.shape[:-1]
    if b.shape[:-1] != lead or c.shape[:-1] != lead:
        raise ValueError("a, b, c must share all leading dims")
    da, db, dc = a.shape[-1], b.shape[-1], c.shape[-1]
    dt = da + db + dc
    L = math.prod(lead) if lead else 1

    # Pack the three learnable scalars into one (3,) array -> SMEM in-kernel.
    w = jnp.concatenate([
        jnp.asarray(params["weight_a"], jnp.float32).reshape(1),
        jnp.asarray(params["weight_b"], jnp.float32).reshape(1),
        jnp.asarray(params["weight_c"], jnp.float32).reshape(1),
    ])

    out_dtype = jnp.promote_types(jnp.result_type(a, b, c), w.dtype)

    # Flatten leading dims (pure row-major reshape, no data movement).
    a2 = a.reshape(L, da)
    b2 = b.reshape(L, db)
    c2 = c.reshape(L, dc)

    # Sublane packing: use the strictest requirement across all dtypes involved.
    sub = max(_sublane_packing(a.dtype), _sublane_packing(b.dtype),
              _sublane_packing(c.dtype), _sublane_packing(out_dtype))

    # Per-row VMEM cost of one set of blocks: last dims pad to 128 lanes.
    per_row_padded_bytes = 128 * (
        jnp.dtype(a.dtype).itemsize + jnp.dtype(b.dtype).itemsize
        + jnp.dtype(c.dtype).itemsize + jnp.dtype(out_dtype).itemsize)

    lt, phys_vmem = _choose_row_tile(L, per_row_padded_bytes, sub)
    grid = (pl.cdiv(L, lt),)

    # Explicit VMEM limit sized from the double-buffered block footprint
    # (+ margin), clamped below physical VMEM with headroom.
    needed = 2 * lt * per_row_padded_bytes + (4 << 20)
    vmem_limit = int(min(max(32 << 20, needed), max(32 << 20, phys_vmem - (8 << 20))))

    # Advisory cost: one multiply per output element, pure bandwidth.
    read_bytes = L * (da * jnp.dtype(a.dtype).itemsize
                      + db * jnp.dtype(b.dtype).itemsize
                      + dc * jnp.dtype(c.dtype).itemsize)
    write_bytes = L * dt * jnp.dtype(out_dtype).itemsize
    cost = pl.CostEstimate(flops=int(L * dt), transcendentals=0,
                           bytes_accessed=int(read_bytes + write_bytes))

    out = pl.pallas_call(
        _weight_fused_kernel,
        out_shape=jax.ShapeDtypeStruct((L, dt), out_dtype),
        grid=grid,
        in_specs=[
            pl.BlockSpec(memory_space=pltpu.MemorySpace.SMEM),  # scalar weights
            pl.BlockSpec((lt, da), lambda i: (i, 0)),
            pl.BlockSpec((lt, db), lambda i: (i, 0)),
            pl.BlockSpec((lt, dc), lambda i: (i, 0)),
        ],
        out_specs=pl.BlockSpec((lt, dt), lambda i: (i, 0)),
        compiler_params=pltpu.CompilerParams(
            dimension_semantics=("parallel",),
            vmem_limit_bytes=vmem_limit,
        ),
        cost_estimate=cost,
    )(w, a2, b2, c2)
    return out.reshape(*lead, dt) if lead else out.reshape(dt)


def init_params():
    # Matches the PyTorch __init__ (torch.ones(1) for each weight).
    return {"weight_a": jnp.ones((1,), jnp.float32),
            "weight_b": jnp.ones((1,), jnp.float32),
            "weight_c": jnp.ones((1,), jnp.float32)}


# ----------------------------------------------------------------------------
if __name__ == "__main__":
    key = jax.random.PRNGKey(0)
    ka, kb, kc, kw = jax.random.split(key, 4)

    # Shapes consistent with how WeightFused is used in the Fine module:
    # a = xyz features (.., 6), b = grouped points (.., 4), c = ppf (.., 3).
    B, N, K = 2, 16, 8
    a = jax.random.normal(ka, (B, N, K, 6), jnp.float32)
    b = jax.random.normal(kb, (B, N, K, 4), jnp.float32)
    c = jax.random.normal(kc, (B, N, K, 3), jnp.float32)

    # Deterministic, non-trivial weights so the multiply is actually exercised
    # (the module initializes them to ones).
    wvals = jax.random.uniform(kw, (3,), jnp.float32, 0.5, 1.5)
    params = {"weight_a": wvals[0:1],
              "weight_b": wvals[1:2],
              "weight_c": wvals[2:3]}

    # L = B*N*K = 256 rows; the auto-tiler caps lt at ~L/4 = 64, so the grid
    # has 4 parallel steps (exercises the pipelined multi-step path).
    out = weight_fused_forward(params, a, b, c)
    out = jax.block_until_ready(out)

    ref = jnp.concatenate([params["weight_a"] * a,
                           params["weight_b"] * b,
                           params["weight_c"] * c], axis=-1)

    assert out.shape == (B, N, K, 13), out.shape
    assert out.dtype == ref.dtype, (out.dtype, ref.dtype)
    assert bool(jnp.all(jnp.isfinite(out)))
    assert bool(jnp.allclose(out, ref, atol=1e-6, rtol=1e-6))
    print("KERNEL_OK")
</pallas_src>

<mosaic_0001>
module attributes {stable_mosaic.version = 11 : i64} {
  func.func @_weight_fused_kernel(%arg0: i32, %arg1: memref<3xf32, #tpu.memory_space<smem>>, %arg2: memref<64x6xf32, #tpu.memory_space<vmem>>, %arg3: memref<64x4xf32, #tpu.memory_space<vmem>>, %arg4: memref<64x3xf32, #tpu.memory_space<vmem>>, %arg5: memref<64x13xf32, #tpu.memory_space<vmem>>) attributes {dimension_semantics = [#tpu.dimension_semantics<parallel>], iteration_bounds = array<i64: 4>, scalar_prefetch = 0 : i64, scratch_operands = 0 : i64, tpu.core_type = #tpu.core_type<tc>, window_params = [{transform_indices = @transform_0, window_bounds = array<i64: 3>}, {transform_indices = @transform_1, window_bounds = array<i64: 64, 6>}, {transform_indices = @transform_2, window_bounds = array<i64: 64, 4>}, {transform_indices = @transform_3, window_bounds = array<i64: 64, 3>}, {transform_indices = @transform_4, window_bounds = array<i64: 64, 13>}]} {
    %c0 = arith.constant 0 : index
    %0 = memref.load %arg1[%c0] : memref<3xf32, #tpu.memory_space<smem>>
    %c1 = arith.constant 1 : index
    %1 = memref.load %arg1[%c1] : memref<3xf32, #tpu.memory_space<smem>>
    %c2 = arith.constant 2 : index
    %2 = memref.load %arg1[%c2] : memref<3xf32, #tpu.memory_space<smem>>
    %c0_0 = arith.constant 0 : index
    %c0_1 = arith.constant 0 : index
    %3 = vector.load %arg2[%c0_0, %c0_1] : memref<64x6xf32, #tpu.memory_space<vmem>>, vector<64x6xf32>
    %4 = vector.broadcast %0 : f32 to vector<64x6xf32>
    %5 = arith.mulf %4, %3 : vector<64x6xf32>
    %c0_2 = arith.constant 0 : index
    %c0_3 = arith.constant 0 : index
    %6 = vector.load %arg3[%c0_2, %c0_3] : memref<64x4xf32, #tpu.memory_space<vmem>>, vector<64x4xf32>
    %7 = vector.broadcast %1 : f32 to vector<64x4xf32>
    %8 = arith.mulf %7, %6 : vector<64x4xf32>
    %c0_4 = arith.constant 0 : index
    %c0_5 = arith.constant 0 : index
    %9 = vector.load %arg4[%c0_4, %c0_5] : memref<64x3xf32, #tpu.memory_space<vmem>>, vector<64x3xf32>
    %10 = vector.broadcast %2 : f32 to vector<64x3xf32>
    %11 = arith.mulf %10, %9 : vector<64x3xf32>
    %12 = tpu.concatenate %5, %8, %11 in 1 : vector<64x6xf32>, vector<64x4xf32>, vector<64x3xf32> -> vector<64x13xf32>
    %c0_6 = arith.constant 0 : index
    %c0_7 = arith.constant 0 : index
    %13 = vector.load %arg5[%c0_6, %c0_7] : memref<64x13xf32, #tpu.memory_space<vmem>>, vector<64x13xf32>
    tpu.vector_store %arg5[%c0_6, %c0_7], %12 {strides = array<i32>} : memref<64x13xf32, #tpu.memory_space<vmem>>, vector<64x13xf32>,
    return
  }
  func.func @transform_0(%arg0: i32) -> i32 {
    %c0_i32 = arith.constant 0 : i32
    %c0_i32_0 = arith.constant 0 : i32
    return %c0_i32 : i32
  }
  func.func @transform_1(%arg0: i32) -> (i32, i32) {
    %c0_i32 = arith.constant 0 : i32
    %c0_i32_0 = arith.constant 0 : i32
    return %arg0, %c0_i32 : i32, i32
  }
  func.func @transform_2(%arg0: i32) -> (i32, i32) {
    %c0_i32 = arith.constant 0 : i32
    %c0_i32_0 = arith.constant 0 : i32
    return %arg0, %c0_i32 : i32, i32
  }
  func.func @transform_3(%arg0: i32) -> (i32, i32) {
    %c0_i32 = arith.constant 0 : i32
    %c0_i32_0 = arith.constant 0 : i32
    return %arg0, %c0_i32 : i32, i32
  }
  func.func @transform_4(%arg0: i32) -> (i32, i32) {
    %c0_i32 = arith.constant 0 : i32
    %c0_i32_0 = arith.constant 0 : i32
    return %arg0, %c0_i32 : i32, i32
  }
}

</mosaic_0001>

<llo_original>
// kernel: tpu_custom_call.1
$region0: #{tpu_custom_call.1}
  #allocation0 [shape = 'u32[]', space=smem, size = 0x4, offset = 0x4, fixed_abs, tag = 'smem constant byte address 0x4 - core index']
  #allocation1 [shape = 'u32[144,128]{1,0:T(1,128)}', space=vmem, size = 0x12000, scoped, tag = 'internal scratch']
  %s0 = inlined_call_operand.vmem [shape: f32[3], index: 0, kind: input, shape index: {}]
  %s1 = inlined_call_operand.vmem [shape: f32[256,6], index: 1, kind: input, shape index: {}]
  %s2 = inlined_call_operand.vmem [shape: f32[256,4], index: 2, kind: input, shape index: {}]
  %s3 = inlined_call_operand.vmem [shape: f32[256,3], index: 3, kind: input, shape index: {}]
  %s4 = inlined_call_operand.vmem [shape: f32[256,13], index: 4, kind: output, shape index: {}]
  %s5 = sld [smem:[#allocation0]]
  $region53: #{tpu_custom_call.1} parent=0
    _
  %s7 = ssub.s32 1, %s5
  %s8 = scalar_select 0, %s7, %s5
  $region1: #{tpu_custom_call.1} parent=0
    #allocation2 [shape = 'u8[512]{0}', space=smem, size = 0x200, scoped, tag = 'input window, operand 0, single buffered']
    #allocation3 [shape = 's32[2]{0}', space=sflag, size = 0x8, scoped, tag = 'scoped memory for tpu_custom_call.1']
    %9 = vsyncpa [#allocation3], 0
    loop: start=0, step=1, limit=6
    $region2: #{tpu_custom_call.1} parent=1 // loop_pre_header
      _
    $region3: #{tpu_custom_call.1} parent=1 // loop_header
      %s11 = sphi 0, %s15
      %p12 = scmp.ge.s32.totalorder %s11, 6
      %s19 = sphi 0, %s19
      %s21 = sphi 0, %s19
      %s22 = sphi 0, %s21
      %s36 = sphi 0, %s22
      %s42 = sphi 0, %s44
      %s45 = sphi 0, %s42
      %s46 = sphi 0, %s45
      %s62 = sphi 0, %s46
      %s68 = sphi 0, %s70
      %s71 = sphi 0, %s68
      %s72 = sphi 0, %s71
      %s88 = sphi 0, %s72
      %s94 = sphi 0, %s96
      %s97 = sphi 0, %s94
      %s98 = sphi 0, %s97
      %s114 = sphi 0, %s98
      %s120 = sphi 0, %s122
      %s123 = sphi 0, %s120
      %s124 = sphi 0, %s123
      %s140 = sphi 0, %s124
    $region4: #{tpu_custom_call.1} parent=1 // loop_header_branch
      %14 = sbr.rel (%p12) target = $region8
    $region5: #{tpu_custom_call.1} parent=1 // loop_body
      %s16 = ssub.s32 %s11, 1
      %s17 = ssub.s32 %s11, 2
      %s18 = sadd.s32 %s11, 1
      %s20 = sadd.s32 %s19, 1
      %p23 = scmp.eq.s32.totalorder %s11, 3
      %p24 = scmp.ne.s32.totalorder %s19, %s21
      %p25 = scmp.eq.s32.totalorder %s11, 0
      %p26 = por %p24, %p25
      %p27 = scmp.ne.s32.totalorder %s19, %s21
      %p28 = scmp.eq.s32.totalorder %s16, 3
      %p29 = por %p27, %p28
      %p30 = scmp.ne.s32.totalorder %s21, %s22
      %p31 = scmp.eq.s32.totalorder %s16, 0
      %p32 = por %p30, %p31
      %p33 = scmp.ne.s32.totalorder %s21, %s22
      %p34 = scmp.eq.s32.totalorder %s17, 3
      %p35 = por %p33, %p34
      %p37 = scmp.ne.s32.totalorder %s22, %s36
      %p38 = scmp.eq.s32.totalorder %s17, 0
      %p39 = por %p37, %p38
      %s40 = ssub.s32 %s11, %s18
      %p41 = scmp.eq.s32.totalorder %s40, 0
      %s43 = sadd.s32 %s42, 1
      %s44 = scalar_select %p41, %s42, %s43
      %p47 = pneg %p41
      %p48 = scmp.eq.s32.totalorder %s11, 3
      %p49 = por %p47, %p48
      %p50 = scmp.ne.s32.totalorder %s42, %s45
      %p51 = scmp.eq.s32.totalorder %s11, 0
      %p52 = por %p50, %p51
      %p53 = scmp.ne.s32.totalorder %s42, %s45
      %p54 = scmp.eq.s32.totalorder %s16, 3
      %p55 = por %p53, %p54
      %p56 = scmp.ne.s32.totalorder %s45, %s46
      %p57 = scmp.eq.s32.totalorder %s16, 0
      %p58 = por %p56, %p57
      %p59 = scmp.ne.s32.totalorder %s45, %s46
      %p60 = scmp.eq.s32.totalorder %s17, 3
      %p61 = por %p59, %p60
      %p63 = scmp.ne.s32.totalorder %s46, %s62
      %p64 = scmp.eq.s32.totalorder %s17, 0
      %p65 = por %p63, %p64
      %s66 = ssub.s32 %s11, %s18
      %p67 = scmp.eq.s32.totalorder %s66, 0
      %s69 = sadd.s32 %s68, 1
      %s70 = scalar_select %p67, %s68, %s69
      %p73 = pneg %p67
      %p74 = scmp.eq.s32.totalorder %s11, 3
      %p75 = por %p73, %p74
      %p76 = scmp.ne.s32.totalorder %s68, %s71
      %p77 = scmp.eq.s32.totalorder %s11, 0
      %p78 = por %p76, %p77
      %p79 = scmp.ne.s32.totalorder %s68, %s71
      %p80 = scmp.eq.s32.totalorder %s16, 3
      %p81 = por %p79, %p80
      %p82 = scmp.ne.s32.totalorder %s71, %s72
      %p83 = scmp.eq.s32.totalorder %s16, 0
      %p84 = por %p82, %p83
      %p85 = scmp.ne.s32.totalorder %s71, %s72
      %p86 = scmp.eq.s32.totalorder %s17, 3
      %p87 = por %p85, %p86
      %p89 = scmp.ne.s32.totalorder %s72, %s88
      %p90 = scmp.eq.s32.totalorder %s17, 0
      %p91 = por %p89, %p90
      %s92 = ssub.s32 %s11, %s18
      %p93 = scmp.eq.s32.totalorder %s92, 0
      %s95 = sadd.s32 %s94, 1
      %s96 = scalar_select %p93, %s94, %s95
      %p99 = pneg %p93
      %p100 = scmp.eq.s32.totalorder %s11, 3
      %p101 = por %p99, %p100
      %p102 = scmp.ne.s32.totalorder %s94, %s97
      %p103 = scmp.eq.s32.totalorder %s11, 0
      %p104 = por %p102, %p103
      %p105 = scmp.ne.s32.totalorder %s94, %s97
      %p106 = scmp.eq.s32.totalorder %s16, 3
      %p107 = por %p105, %p106
      %p108 = scmp.ne.s32.totalorder %s97, %s98
      %p109 = scmp.eq.s32.totalorder %s16, 0
      %p110 = por %p108, %p109
      %p111 = scmp.ne.s32.totalorder %s97, %s98
      %p112 = scmp.eq.s32.totalorder %s17, 3
      %p113 = por %p111, %p112
      %p115 = scmp.ne.s32.totalorder %s98, %s114
      %p116 = scmp.eq.s32.totalorder %s17, 0
      %p117 = por %p115, %p116
      %s118 = ssub.s32 %s11, %s18
      %p119 = scmp.eq.s32.totalorder %s118, 0
      %s121 = sadd.s32 %s120, 1
      %s122 = scalar_select %p119, %s120, %s121
      %p125 = pneg %p119
      %p126 = scmp.eq.s32.totalorder %s11, 3
      %p127 = por %p125, %p126
      %p128 = scmp.ne.s32.totalorder %s120, %s123
      %p129 = scmp.eq.s32.totalorder %s11, 0
      %p130 = por %p128, %p129
      %p131 = scmp.ne.s32.totalorder %s120, %s123
      %p132 = scmp.eq.s32.totalorder %s16, 3
      %p133 = por %p131, %p132
      %p134 = scmp.ne.s32.totalorder %s123, %s124
      %p135 = scmp.eq.s32.totalorder %s16, 0
      %p136 = por %p134, %p135
      %p137 = scmp.ne.s32.totalorder %s123, %s124
      %p138 = scmp.eq.s32.totalorder %s17, 3
      %p139 = por %p137, %p138
      %p141 = scmp.ne.s32.totalorder %s124, %s140
      %p142 = scmp.eq.s32.totalorder %s17, 0
      %p143 = por %p141, %p142
      %p144 = scmp.le.s32.totalorder 1, %s11
      %p145 = scmp.lt.s32.totalorder %s11, 5
      %p146 = pnand %p144, %p145
      %p147 = pneg %p146
      // Predicated region
      $region9: #{tpu_custom_call.1} parent=5 // pred_check
        _
      $region10: #{tpu_custom_call.1} parent=5 // pred_check_branch
        %149 = sbr.rel (%p146) target = $region12
      $region11: #{tpu_custom_call.1} parent=5 // pred_region
        %s150 = ssub.s32 %s11, 1
        // Predicated region
        $region13: #{tpu_custom_call.1} parent=11 // pred_check
          %p151 = pneg %p32
        $region14: #{tpu_custom_call.1} parent=11 // pred_check_branch
          %153 = sbr.rel (%p151) target = $region16
        $region15: #{tpu_custom_call.1} parent=11 // pred_region
          %s155 = ssub.s32 16, 16
          %156 = vsyncadd [#allocation3], %s155
          %s158 = sshll.u32 %s0, 4
          %s159 = int_to_ptr.vmem [resolvable:$true] %s158
          %161 = dma.vmem_to_smem %s159, 16, [#allocation2], [#allocation3]
        $region16: #{tpu_custom_call.1} parent=11 // pred_fallthru
          _
      $region12: #{tpu_custom_call.1} parent=5 // pred_fallthru
        _
      %p162 = scmp.lt.s32.totalorder %s11, 4
      // Predicated region
      $region17: #{tpu_custom_call.1} parent=5 // pred_check
        %p163 = pneg %p162
      $region18: #{tpu_custom_call.1} parent=5 // pred_check_branch
        %165 = sbr.rel (%p163) target = $region20
      $region19: #{tpu_custom_call.1} parent=5 // pred_region
        // Predicated region
        $region21: #{tpu_custom_call.1} parent=19 // pred_check
          %p166 = pneg %p52
        $region22: #{tpu_custom_call.1} parent=19 // pred_check_branch
          %168 = sbr.rel (%p166) target = $region24
        $region23: #{tpu_custom_call.1} parent=19 // pred_region
          %s169 = smul.u32 8, %s11
          %p170 = scmp.lt.s32.totalorder %s169, 31
          %s171 = scalar_select %p170, %s169, 31
          %s172 = smul.addr %s171, 8
          %s173 = scalar_lea.vmem %s1, %s172
          %s174 = smul.u32 8, %s11
        $region24: #{tpu_custom_call.1} parent=19 // pred_fallthru
          _
        // Predicated region
        $region25: #{tpu_custom_call.1} parent=19 // pred_check
          %p175 = pneg %p78
        $region26: #{tpu_custom_call.1} parent=19 // pred_check_branch
          %177 = sbr.rel (%p175) target = $region28
        $region27: #{tpu_custom_call.1} parent=19 // pred_region
          %s178 = smul.u32 8, %s11
          %p179 = scmp.lt.s32.totalorder %s178, 31
          %s180 = scalar_select %p179, %s178, 31
          %s181 = smul.addr %s180, 8
          %s182 = scalar_lea.vmem %s2, %s181
          %s183 = smul.u32 8, %s11
        $region28: #{tpu_custom_call.1} parent=19 // pred_fallthru
          _
        // Predicated region
        $region29: #{tpu_custom_call.1} parent=19 // pred_check
          %p184 = pneg %p104
        $region30: #{tpu_custom_call.1} parent=19 // pred_check_branch
          %186 = sbr.rel (%p184) target = $region32
        $region31: #{tpu_custom_call.1} parent=19 // pred_region
          %s187 = smul.u32 8, %s11
          %p188 = scmp.lt.s32.totalorder %s187, 31
          %s189 = scalar_select %p188, %s187, 31
          %s190 = smul.addr %s189, 8
          %s191 = scalar_lea.vmem %s3, %s190
          %s192 = smul.u32 8, %s11
        $region32: #{tpu_custom_call.1} parent=19 // pred_fallthru
          _
      $region20: #{tpu_custom_call.1} parent=5 // pred_fallthru
        _
      %p193 = scmp.le.s32.totalorder 1, %s11
      %p194 = scmp.lt.s32.totalorder %s11, 5
      %p195 = pnand %p193, %p194
      %p196 = pneg %p195
      // Predicated region
      $region33: #{tpu_custom_call.1} parent=5 // pred_check
        _
      $region34: #{tpu_custom_call.1} parent=5 // pred_check_branch
        %198 = sbr.rel (%p195) target = $region36
      $region35: #{tpu_custom_call.1} parent=5 // pred_region
        %s199 = ssub.s32 %s11, 1
        // Predicated region
        $region37: #{tpu_custom_call.1} parent=35 // pred_check
          %p200 = pneg %p32
        $region38: #{tpu_custom_call.1} parent=35 // pred_check_branch
          %202 = sbr.rel (%p200) target = $region40
        $region39: #{tpu_custom_call.1} parent=35 // pred_region
          %203 = dma.done [#allocation3], 16
        $region40: #{tpu_custom_call.1} parent=35 // pred_fallthru
          _
        %204 = sfence
        %p205 = pneg %p32
        %p206 = pneg %p29
        %s207 = smul.u32 8, %s16
        %p208 = scmp.lt.s32.totalorder %s207, 31
        %s209 = scalar_select %p208, %s207, 31
        %s210 = smul.addr %s209, 8
        %s211 = scalar_lea.vmem %s1, %s210
        %p212 = pneg %p58
        %p213 = pneg %p55
        %s214 = smul.u32 8, %s16
        %p215 = scmp.lt.s32.totalorder %s214, 31
        %s216 = scalar_select %p215, %s214, 31
        %s217 = smul.addr %s216, 8
        %s218 = scalar_lea.vmem %s2, %s217
        %p219 = pneg %p84
        %p220 = pneg %p81
        %s221 = smul.u32 8, %s16
        %p222 = scmp.lt.s32.totalorder %s221, 31
        %s223 = scalar_select %p222, %s221, 31
        %s224 = smul.addr %s223, 8
        %s225 = scalar_lea.vmem %s3, %s224
        %p226 = pneg %p110
        %p227 = pneg %p107
        %p228 = pneg %p136
        %p229 = pneg %p133
        %s230 = smul.u32 8, %s16
        %p231 = scmp.lt.s32.totalorder %s230, 31
        %s232 = scalar_select %p231, %s230, 31
        %s233 = smul.addr %s232, 8
        %s234 = scalar_lea.vmem %s4, %s233
        %s235 = smul.u32 8, %s16
        %p236 = scmp.lt.s32.totalorder %s235, 31
        %s237 = scalar_select %p236, %s235, 31
        %s238 = smul.addr %s237, 8
        %s239 = scalar_lea.vmem %s1, %s238
        %s240 = smul.u32 8, %s16
        %s241 = smul.u32 8, %s16
        %p242 = scmp.lt.s32.totalorder %s241, 31
        %s243 = scalar_select %p242, %s241, 31
        %s244 = smul.addr %s243, 8
        %s245 = scalar_lea.vmem %s2, %s244
        %s246 = smul.u32 8, %s16
        %s247 = smul.u32 8, %s16
        %p248 = scmp.lt.s32.totalorder %s247, 31
        %s249 = scalar_select %p248, %s247, 31
        %s250 = smul.addr %s249, 8
        %s251 = scalar_lea.vmem %s3, %s250
        %s252 = smul.u32 8, %s16
        %s253 = smul.u32 8, %s16
        %p254 = scmp.lt.s32.totalorder %s253, 31
        %s255 = scalar_select %p254, %s253, 31
        %s256 = smul.addr %s255, 8
        %s257 = scalar_lea.vmem %s4, %s256
        %s258 = smul.u32 8, %s16
        %s259 = sld [smem:[#allocation2]]
        %s260 = sld [smem:[#allocation2 + $0x1]]
        %s261 = sld [smem:[#allocation2 + $0x2]]
        %v262 = vld [vmem:[%s239] sm:$0xff]
        %v263 = vld [vmem:[%s239 + $0x8] sm:$0xff]
        %v264 = vld [vmem:[%s239 + $0x10] sm:$0xff]
        %v265 = vld [vmem:[%s239 + $0x18] sm:$0xff]
        %v266 = vld [vmem:[%s239 + $0x20] sm:$0xff]
        %v267 = vld [vmem:[%s239 + $0x28] sm:$0xff]
        %v268 = vld [vmem:[%s239 + $0x30] sm:$0xff]
        %v269 = vld [vmem:[%s239 + $0x38] sm:$0xff]
        %v270 = vstv %s259
        %v271 = vmul.f32 %v270, %v262
        %v272 = vmul.f32 %v270, %v263
        %v273 = vmul.f32 %v270, %v264
        %v274 = vmul.f32 %v270, %v265
        %v275 = vmul.f32 %v270, %v266
        %v276 = vmul.f32 %v270, %v267
        %v277 = vmul.f32 %v270, %v268
        %v278 = vmul.f32 %v270, %v269
        %v279 = vld [vmem:[%s245] sm:$0xff]
        %v280 = vld [vmem:[%s245 + $0x8] sm:$0xff]
        %v281 = vld [vmem:[%s245 + $0x10] sm:$0xff]
        %v282 = vld [vmem:[%s245 + $0x18] sm:$0xff]
        %v283 = vld [vmem:[%s245 + $0x20] sm:$0xff]
        %v284 = vld [vmem:[%s245 + $0x28] sm:$0xff]
        %v285 = vld [vmem:[%s245 + $0x30] sm:$0xff]
        %v286 = vld [vmem:[%s245 + $0x38] sm:$0xff]
        %v287 = vstv %s260
        %v288 = vmul.f32 %v287, %v279
        %v289 = vmul.f32 %v287, %v280
        %v290 = vmul.f32 %v287, %v281
        %v291 = vmul.f32 %v287, %v282
        %v292 = vmul.f32 %v287, %v283
        %v293 = vmul.f32 %v287, %v284
        %v294 = vmul.f32 %v287, %v285
        %v295 = vmul.f32 %v287, %v286
        %v296 = vld [vmem:[%s251] sm:$0xff]
        %v297 = vld [vmem:[%s251 + $0x8] sm:$0xff]
        %v298 = vld [vmem:[%s251 + $0x10] sm:$0xff]
        %v299 = vld [vmem:[%s251 + $0x18] sm:$0xff]
        %v300 = vld [vmem:[%s251 + $0x20] sm:$0xff]
        %v301 = vld [vmem:[%s251 + $0x28] sm:$0xff]
        %v302 = vld [vmem:[%s251 + $0x30] sm:$0xff]
        %v303 = vld [vmem:[%s251 + $0x38] sm:$0xff]
        %v304 = vstv %s261
        %v305 = vmul.f32 %v304, %v296
        %v306 = vmul.f32 %v304, %v297
        %v307 = vmul.f32 %v304, %v298
        %v308 = vmul.f32 %v304, %v299
        %v309 = vmul.f32 %v304, %v300
        %v310 = vmul.f32 %v304, %v301
        %v311 = vmul.f32 %v304, %v302
        %v312 = vmul.f32 %v304, %v303
        %321 = vrot.lane.b32.xlu0 %v288, 6
        %v322 = vpop.permute.xlu0 %321
        %323 = vrot.lane.b32.xlu0 %v289, 6
        %v324 = vpop.permute.xlu0 %323
        %325 = vrot.lane.b32.xlu0 %v290, 6
        %v326 = vpop.permute.xlu0 %325
        %327 = vrot.lane.b32.xlu0 %v291, 6
        %v328 = vpop.permute.xlu0 %327
        %329 = vrot.lane.b32.xlu0 %v292, 6
        %v330 = vpop.permute.xlu0 %329
        %331 = vrot.lane.b32.xlu0 %v293, 6
        %v332 = vpop.permute.xlu0 %331
        %333 = vrot.lane.b32.xlu0 %v294, 6
        %v334 = vpop.permute.xlu0 %333
        %335 = vrot.lane.b32.xlu0 %v295, 6
        %v336 = vpop.permute.xlu0 %335
        %353 = vrot.lane.b32.xlu0 %v305, 10
        %v354 = vpop.permute.xlu0 %353
        %355 = vrot.lane.b32.xlu0 %v306, 10
        %v356 = vpop.permute.xlu0 %355
        %357 = vrot.lane.b32.xlu0 %v307, 10
        %v358 = vpop.permute.xlu0 %357
        %359 = vrot.lane.b32.xlu0 %v308, 10
        %v360 = vpop.permute.xlu0 %359
        %361 = vrot.lane.b32.xlu0 %v309, 10
        %v362 = vpop.permute.xlu0 %361
        %363 = vrot.lane.b32.xlu0 %v310, 10
        %v364 = vpop.permute.xlu0 %363
        %365 = vrot.lane.b32.xlu0 %v311, 10
        %v366 = vpop.permute.xlu0 %365
        %367 = vrot.lane.b32.xlu0 %v312, 10
        %v368 = vpop.permute.xlu0 %367
        %vm377 = vcmask 48128
        %v378 = vsel %vm377, %v271, %v322
        %v379 = vsel %vm377, %v272, %v324
        %v380 = vsel %vm377, %v273, %v326
        %v381 = vsel %vm377, %v274, %v328
        %v382 = vsel %vm377, %v275, %v330
        %v383 = vsel %vm377, %v276, %v332
        %v384 = vsel %vm377, %v277, %v334
        %v385 = vsel %vm377, %v278, %v336
        %vm386 = vcmask 80896
        %v387 = vsel %vm386, %v378, %v354
        %v388 = vsel %vm386, %v379, %v356
        %v389 = vsel %vm386, %v380, %v358
        %v390 = vsel %vm386, %v381, %v360
        %v391 = vsel %vm386, %v382, %v362
        %v392 = vsel %vm386, %v383, %v364
        %v393 = vsel %vm386, %v384, %v366
        %v394 = vsel %vm386, %v385, %v368
        %vm395 = vcmask 105472
        %396 = vst.msk [vmem:[%s257] sm:$0xff] %vm395, %v387
        %397 = vst.msk [vmem:[%s257 + $0x8] sm:$0xff] %vm395, %v388
        %398 = vst.msk [vmem:[%s257 + $0x10] sm:$0xff] %vm395, %v389
        %399 = vst.msk [vmem:[%s257 + $0x18] sm:$0xff] %vm395, %v390
        %400 = vst.msk [vmem:[%s257 + $0x20] sm:$0xff] %vm395, %v391
        %401 = vst.msk [vmem:[%s257 + $0x28] sm:$0xff] %vm395, %v392
        %402 = vst.msk [vmem:[%s257 + $0x30] sm:$0xff] %vm395, %v393
        %403 = vst.msk [vmem:[%s257 + $0x38] sm:$0xff] %vm395, %v394
        %s404 = smul.u32 8, %s16
        %p405 = scmp.lt.s32.totalorder %s404, 31
        %s406 = scalar_select %p405, %s404, 31
        %s407 = smul.addr %s406, 8
        %s408 = scalar_lea.vmem %s4, %s407
        // Predicated region
        $region41: #{tpu_custom_call.1} parent=35 // pred_check
          %p409 = pneg %p133
        $region42: #{tpu_custom_call.1} parent=35 // pred_check_branch
          %411 = sbr.rel (%p409) target = $region44
        $region43: #{tpu_custom_call.1} parent=35 // pred_region
          %s412 = smul.u32 8, %s16
        $region44: #{tpu_custom_call.1} parent=35 // pred_fallthru
          _
      $region36: #{tpu_custom_call.1} parent=5 // pred_fallthru
        _
      %p413 = scmp.le.s32.totalorder 2, %s11
      // Predicated region
      $region45: #{tpu_custom_call.1} parent=5 // pred_check
        %p414 = pneg %p413
      $region46: #{tpu_custom_call.1} parent=5 // pred_check_branch
        %416 = sbr.rel (%p414) target = $region48
      $region47: #{tpu_custom_call.1} parent=5 // pred_region
        %s417 = ssub.s32 %s11, 2
        // Predicated region
        $region49: #{tpu_custom_call.1} parent=47 // pred_check
          %p418 = pneg %p139
        $region50: #{tpu_custom_call.1} parent=47 // pred_check_branch
          %420 = sbr.rel (%p418) target = $region52
        $region51: #{tpu_custom_call.1} parent=47 // pred_region
          %s421 = smul.u32 8, %s17
          %p422 = scmp.lt.s32.totalorder %s421, 31
          %s423 = scalar_select %p422, %s421, 31
          %s424 = smul.addr %s423, 8
          %s425 = scalar_lea.vmem %s4, %s424
        $region52: #{tpu_custom_call.1} parent=47 // pred_fallthru
          _
      $region48: #{tpu_custom_call.1} parent=5 // pred_fallthru
        _
    $region6: #{tpu_custom_call.1} parent=1 // loop_footer
      %s15 = sadd.s32 1, %s11
    $region7: #{tpu_custom_call.1} parent=1 // loop_footer_branch
      %10 = sbr.rel target = $region3
    $region8: #{tpu_custom_call.1} parent=1 // loop_exit
      _
    %426 = vsyncpa [#allocation3], 1
    %s427 = scalar_lea.sflag [#allocation3], 1
    %428 = vsyncpa %s427, 1

</llo_original>
